<compile_context>
chip_gen: v7x
topology: tpu7x:2x2x1
jax: 0.10.0
libtpu: 0.0.40
codegen_flags: <defaults>
</compile_context>

<pallas_src>
import functools

import jax
import jax.numpy as jnp
from jax import lax
from jax.experimental import pallas as pl
from jax.experimental.pallas import tpu as pltpu

_EPS = 1e-6  # matches reference one_hot(); focal_loss's `eps` arg is deprecated/unused


def _focal_tile_row(logits_ref, target_ref, *, gamma, ignore_index, n_cols):
    """One (1, C, ts) logits tile -> ((1, ts) partial loss row, (1, ts) valid mask).

    Row = sum_c (one_hot + eps) * (1 - p)^gamma * log_softmax  (NO -alpha yet),
    already zeroed at masked (out-of-bounds or ignored) positions.
    """
    C, ts = logits_ref.shape[1], logits_ref.shape[2]
    x = logits_ref[0].astype(jnp.float32)               # (C, ts) f32, cast in-kernel
    t = target_ref[0]                                    # (1, ts) int32

    # valid = in-bounds column (handles the ragged last tile) AND not ignored
    col = pl.program_id(1) * ts + lax.broadcasted_iota(jnp.int32, (1, ts), 1)
    valid = jnp.logical_and(col < n_cols, t != ignore_index)

    # softmax / log_softmax over the class (sublane) axis
    m = jnp.max(x, axis=0, keepdims=True)                # (1, ts)
    z = x - m
    ez = jnp.exp(z)                                      # (C, ts)
    s = jnp.sum(ez, axis=0, keepdims=True)               # (1, ts)
    inv_s = 1.0 / s
    p = ez * inv_s                                       # softmax
    logp = z - jnp.log(s)                                # log_softmax

    # (1 - p)^gamma -- specialize small integer gamma to VPU multiplies
    base = 1.0 - p
    g = float(gamma)
    if g == int(g) and 0 <= int(g) <= 8:
        ig = int(g)
        if ig == 0:
            weight = jnp.ones_like(base)
        else:
            weight = base
            for _ in range(ig - 1):
                weight = weight * base
    else:
        weight = jnp.power(base, g)

    wlogp = weight * logp                                # (C, ts); -alpha hoisted out

    # one_hot(target) + eps (matches reference one_hot's +eps everywhere)
    cls = lax.broadcasted_iota(jnp.int32, (C, ts), 0)
    onehot = jnp.where(cls == t, 1.0, 0.0) + _EPS

    row = jnp.sum(onehot * wlogp, axis=0, keepdims=True)  # (1, ts)
    row = jnp.where(valid, row, 0.0)
    return row, valid


def _focal_none_kernel(logits_ref, target_ref, loss_ref, *,
                       alpha, gamma, ignore_index, n_cols):
    row, _ = _focal_tile_row(logits_ref, target_ref, gamma=gamma,
                             ignore_index=ignore_index, n_cols=n_cols)
    loss_ref[0] = ((-alpha) * row).astype(loss_ref.dtype)


def _focal_reduce_kernel(logits_ref, target_ref, psum_ref, pcnt_ref, *,
                         gamma, ignore_index, n_cols):
    row, valid = _focal_tile_row(logits_ref, target_ref, gamma=gamma,
                                 ignore_index=ignore_index, n_cols=n_cols)
    # Tiny per-tile partials: one (8,128) vreg each (alpha folded in later).
    psum_ref[0, 0] = jnp.full((8, 128), jnp.sum(row), dtype=jnp.float32)
    pcnt_ref[0, 0] = jnp.full((8, 128), jnp.sum(valid.astype(jnp.float32)),
                              dtype=jnp.float32)


def _vmem_capacity_bytes():
    try:
        return int(pltpu.get_tpu_info().vmem_capacity_bytes)
    except Exception:
        return 64 * 1024 * 1024


def focal_loss_pallas(logits, target, alpha=0.25, gamma=2.0,
                      reduction="none", ignore_index=-1):
    """logits: (N, C, *spatial) float (any float dtype); target: (N, *spatial) int."""
    if logits.ndim < 2:
        raise ValueError(f"Invalid input shape, we expect (N, C, *). Got: {logits.shape}")
    if reduction not in ("none", "mean", "sum"):
        raise NotImplementedError(f"Invalid reduction mode: {reduction}")
    if logits.shape[0] != target.shape[0]:
        raise ValueError("Expected input batch_size to match target batch_size.")

    N = logits.shape[0]
    C = logits.shape[1]
    spatial = logits.shape[2:]
    out_shape = (N,) + spatial
    S = 1
    for d in spatial:
        S *= int(d)

    # Contiguous reshapes for the spatial case.  Degenerate classification
    # inputs (S == 1) put the batch on the lane axis instead (one small
    # transpose) so we don't compute 127/128 lanes of padding.
    if S == 1 and N > 1:
        x = jnp.transpose(logits.reshape(N, C)).reshape(1, C, N)
        t = target.reshape(1, 1, N).astype(jnp.int32)
        bN, bS = 1, N
    else:
        x = logits.reshape(N, C, S)
        t = target.reshape(N, 1, S).astype(jnp.int32)
        bN, bS = N, S

    # ---- tile sizing ----------------------------------------------------
    itemsize = jnp.dtype(x.dtype).itemsize
    cap = _vmem_capacity_bytes()
    # VMEM bytes per spatial column: double-buffered logits + target + loss
    # tiles plus ~6 live (C, ts) f32 intermediates; account for sublane
    # padding (C rounded up to 8 for f32 layouts).
    c8 = pl.cdiv(C, 8) * 8
    per_col = 2 * c8 * max(4, itemsize) + 6 * c8 * 4 + 16
    budget = max(2 << 20, int(cap * 0.30))
    ts = max(128, (budget // per_col) // 128 * 128)

    # Keep >= ~8 grid steps so both v7x TensorCores get work and the pipeline
    # has a second step to overlap DMA behind.
    min_steps = max(1, -(-8 // bN))
    if min_steps > 1 and bS > 128:
        cap_ts = max(128, ((-(-bS // min_steps)) + 127) // 128 * 128)
        ts = min(ts, cap_ts)

    s_ceil = pl.cdiv(bS, 128) * 128
    ts = min(ts, s_ceil)
    if bS < 128:
        ts = bS                      # block == full (tiny) lane extent
    n_s = pl.cdiv(bS, ts)            # ragged last tile handled by in-kernel mask

    working = ts * per_col
    vmem_limit = int(min(cap - (4 << 20), max(32 << 20, working + (8 << 20))))

    grid = (bN, n_s)
    in_specs = [
        pl.BlockSpec((1, C, ts), lambda b, s: (b, 0, s)),
        pl.BlockSpec((1, 1, ts), lambda b, s: (b, 0, s)),
    ]
    cparams = pltpu.CompilerParams(
        dimension_semantics=("parallel", "parallel"),
        vmem_limit_bytes=vmem_limit)

    if reduction == "none":
        kernel = functools.partial(
            _focal_none_kernel, alpha=float(alpha), gamma=float(gamma),
            ignore_index=int(ignore_index), n_cols=bS)
        loss = pl.pallas_call(
            kernel,
            out_shape=jax.ShapeDtypeStruct((bN, 1, bS), jnp.float32),
            grid_spec=pltpu.PrefetchScalarGridSpec(
                num_scalar_prefetch=0, grid=grid, in_specs=in_specs,
                out_specs=pl.BlockSpec((1, 1, ts), lambda b, s: (b, 0, s))),
            compiler_params=cparams,
        )(x, t)
        loss = loss[:, 0, :]
        return loss.reshape(out_shape)

    # reduction == 'mean' / 'sum': fused in-kernel partial sums + valid counts
    kernel = functools.partial(
        _focal_reduce_kernel, gamma=float(gamma),
        ignore_index=int(ignore_index), n_cols=bS)
    psum, pcnt = pl.pallas_call(
        kernel,
        out_shape=(jax.ShapeDtypeStruct((bN, n_s, 8, 128), jnp.float32),
                   jax.ShapeDtypeStruct((bN, n_s, 8, 128), jnp.float32)),
        grid_spec=pltpu.PrefetchScalarGridSpec(
            num_scalar_prefetch=0, grid=grid, in_specs=in_specs,
            out_specs=[
                pl.BlockSpec((1, 1, 8, 128), lambda b, s: (b, s, 0, 0)),
                pl.BlockSpec((1, 1, 8, 128), lambda b, s: (b, s, 0, 0)),
            ]),
        compiler_params=cparams,
    )(x, t)

    total = (-float(alpha)) * jnp.sum(psum[:, :, 0, 0])   # alpha folded here
    if reduction == "sum":
        return total
    n_valid = jnp.maximum(jnp.sum(pcnt[:, :, 0, 0]), 1.0)
    return total / n_valid


class FocalLoss:
    """JAX/Pallas mirror of the PyTorch FocalLoss module (no learnable params)."""

    def __init__(self, alpha=0.25, gamma=2.0, reduction="none",
                 ignore_index=-1, eps=None):
        self.alpha = alpha
        self.gamma = gamma
        self.reduction = reduction
        self.ignore_index = ignore_index
        self.eps = eps  # deprecated in reference; unused (reference hardcodes 1e-6)

    def __call__(self, logits, target):
        return focal_loss_pallas(logits, target, self.alpha, self.gamma,
                                 self.reduction, self.ignore_index)


def _focal_ref(logits, target, alpha, gamma, ignore_index, reduction):
    """Pure-JAX reference for sanity checking."""
    C = logits.shape[1]
    x = jnp.moveaxis(logits, 1, -1).astype(jnp.float32)      # (N, *, C)
    p = jax.nn.softmax(x, axis=-1)
    logp = jax.nn.log_softmax(x, axis=-1)
    onehot = jax.nn.one_hot(target, C, dtype=jnp.float32) + 1e-6
    focal = -alpha * jnp.power(1.0 - p, gamma) * logp
    loss = jnp.sum(onehot * focal, axis=-1)
    valid = (target != ignore_index)
    loss = jnp.where(valid, loss, 0.0)
    if reduction == "none":
        return loss
    if reduction == "mean":
        return jnp.sum(loss) / jnp.maximum(jnp.sum(valid), 1)
    return jnp.sum(loss)


if __name__ == "__main__":
    key = jax.random.PRNGKey(0)
    k1, k2, k3, k4, k5, k6, k7 = jax.random.split(key, 7)

    # dense (N, C, H, W) case
    N, C, H, W = 2, 4, 16, 16
    logits = jax.random.normal(k1, (N, C, H, W), dtype=jnp.float32)
    target = jax.random.randint(k2, (N, H, W), 0, C, dtype=jnp.int32)

    crit_none = FocalLoss(alpha=0.25, gamma=2.0, reduction="none")
    out_none = jax.block_until_ready(crit_none(logits, target))
    ref_none = _focal_ref(logits, target, 0.25, 2.0, -1, "none")
    assert out_none.shape == (N, H, W)
    assert jnp.allclose(out_none, ref_none, atol=1e-5, rtol=1e-5)

    # reduction='mean' with ignored targets (fused in-kernel sum + valid count)
    target_ig = jnp.where(jax.random.uniform(k3, (N, H, W)) < 0.2, -1, target)
    crit_mean = FocalLoss(alpha=0.5, gamma=2.0, reduction="mean", ignore_index=-1)
    out_mean = jax.block_until_ready(crit_mean(logits, target_ig))
    ref_mean = _focal_ref(logits, target_ig, 0.5, 2.0, -1, "mean")
    assert jnp.allclose(out_mean, ref_mean, atol=1e-5, rtol=1e-5)

    # bf16 logits (no wrapper cast; in-kernel f32 math), reduction='sum'
    logits_bf16 = logits.astype(jnp.bfloat16)
    crit_sum = FocalLoss(alpha=0.25, gamma=2.0, reduction="sum")
    out_sum = jax.block_until_ready(crit_sum(logits_bf16, target))
    ref_sum = _focal_ref(logits_bf16, target, 0.25, 2.0, -1, "sum")
    assert jnp.allclose(out_sum, ref_sum, atol=1e-3, rtol=1e-4)

    # ragged spatial tail (S = 13*11 = 143, not a multiple of 128): masked
    # in-kernel, no jnp.pad copy of the logits
    Hr, Wr = 13, 11
    logits_r = jax.random.normal(k4, (N, C, Hr, Wr), dtype=jnp.float32)
    target_r = jax.random.randint(k5, (N, Hr, Wr), 0, C, dtype=jnp.int32)
    out_r_none = jax.block_until_ready(
        FocalLoss(0.25, 2.0, "none")(logits_r, target_r))
    ref_r_none = _focal_ref(logits_r, target_r, 0.25, 2.0, -1, "none")
    assert out_r_none.shape == (N, Hr, Wr)
    assert jnp.allclose(out_r_none, ref_r_none, atol=1e-5, rtol=1e-5)
    out_r_mean = jax.block_until_ready(
        FocalLoss(0.25, 2.0, "mean")(logits_r, target_r))
    ref_r_mean = _focal_ref(logits_r, target_r, 0.25, 2.0, -1, "mean")
    assert jnp.allclose(out_r_mean, ref_r_mean, atol=1e-5, rtol=1e-5)

    # degenerate classification case (N, C): batch rides the lane axis
    Nc, Cc = 16, 8
    logits_cls = jax.random.normal(k6, (Nc, Cc), dtype=jnp.float32)
    target_cls = jax.random.randint(k7, (Nc,), 0, Cc, dtype=jnp.int32)
    out_cls_none = jax.block_until_ready(
        FocalLoss(0.25, 2.0, "none")(logits_cls, target_cls))
    ref_cls_none = _focal_ref(logits_cls, target_cls, 0.25, 2.0, -1, "none")
    assert out_cls_none.shape == (Nc,)
    assert jnp.allclose(out_cls_none, ref_cls_none, atol=1e-5, rtol=1e-5)
    out_cls_mean = jax.block_until_ready(
        FocalLoss(0.25, 2.0, "mean")(logits_cls, target_cls))
    ref_cls_mean = _focal_ref(logits_cls, target_cls, 0.25, 2.0, -1, "mean")
    assert jnp.allclose(out_cls_mean, ref_cls_mean, atol=1e-5, rtol=1e-5)

    print("KERNEL_OK")
</pallas_src>

<mosaic_0001>
module attributes {stable_mosaic.version = 11 : i64} {
  func.func @_focal_none_kernel(%arg0: i32, %arg1: i32, %arg2: memref<1x4x128xf32, #tpu.memory_space<vmem>>, %arg3: memref<1x1x128xi32, #tpu.memory_space<vmem>>, %arg4: memref<1x1x128xf32, #tpu.memory_space<vmem>>) attributes {dimension_semantics = [#tpu.dimension_semantics<parallel>, #tpu.dimension_semantics<parallel>], iteration_bounds = array<i64: 2, 2>, scalar_prefetch = 0 : i64, scratch_operands = 0 : i64, tpu.core_type = #tpu.core_type<tc>, window_params = [{transform_indices = @transform_0, window_bounds = array<i64: 1, 4, 128>}, {transform_indices = @transform_1, window_bounds = array<i64: 1, 1, 128>}, {transform_indices = @transform_2, window_bounds = array<i64: 1, 1, 128>}]} {
    %c0 = arith.constant 0 : index
    %c0_0 = arith.constant 0 : index
    %c0_1 = arith.constant 0 : index
    %0 = vector.load %arg2[%c0, %c0_0, %c0_1] : memref<1x4x128xf32, #tpu.memory_space<vmem>>, vector<1x4x128xf32>
    %1 = vector.shape_cast %0 : vector<1x4x128xf32> to vector<4x128xf32>
    %c0_2 = arith.constant 0 : index
    %c0_3 = arith.constant 0 : index
    %c0_4 = arith.constant 0 : index
    %2 = vector.load %arg3[%c0_2, %c0_3, %c0_4] : memref<1x1x128xi32, #tpu.memory_space<vmem>>, vector<1x1x128xi32>
    %3 = vector.shape_cast %2 : vector<1x1x128xi32> to vector<1x128xi32>
    %c128_i32 = arith.constant 128 : i32
    %4 = arith.muli %arg1, %c128_i32 : i32
    %5 = tpu.iota {dimensions = array<i32: 1>} : vector<1x128xi32>
    %6 = vector.broadcast %4 : i32 to vector<1x128xi32>
    %7 = arith.addi %6, %5 : vector<1x128xi32>
    %c256_i32 = arith.constant 256 : i32
    %8 = vector.broadcast %c256_i32 : i32 to vector<1x128xi32>
    %9 = arith.cmpi slt, %7, %8 : vector<1x128xi32>
    %c-1_i32 = arith.constant -1 : i32
    %10 = vector.broadcast %c-1_i32 : i32 to vector<1x128xi32>
    %11 = arith.cmpi ne, %3, %10 : vector<1x128xi32>
    %12 = arith.andi %9, %11 : vector<1x128xi1>
    %cst = arith.constant dense<0xFF800000> : vector<128xf32>
    %13 = vector.multi_reduction <maximumf>, %1, %cst [0] : vector<4x128xf32> to vector<128xf32>
    %14 = vector.shape_cast %13 : vector<128xf32> to vector<1x128xf32>
    %15 = vector.broadcast %14 : vector<1x128xf32> to vector<4x128xf32>
    %16 = arith.subf %1, %15 : vector<4x128xf32>
    %17 = math.exp %16 : vector<4x128xf32>
    %cst_5 = arith.constant dense<0.000000e+00> : vector<128xf32>
    %18 = vector.multi_reduction <add>, %17, %cst_5 [0] : vector<4x128xf32> to vector<128xf32>
    %19 = vector.shape_cast %18 : vector<128xf32> to vector<1x128xf32>
    %cst_6 = arith.constant 1.000000e+00 : f32
    %20 = vector.broadcast %cst_6 : f32 to vector<1x128xf32>
    %21 = arith.divf %20, %19 : vector<1x128xf32>
    %22 = vector.broadcast %21 : vector<1x128xf32> to vector<4x128xf32>
    %23 = arith.mulf %17, %22 : vector<4x128xf32>
    %24 = math.log %19 : vector<1x128xf32>
    %25 = vector.broadcast %24 : vector<1x128xf32> to vector<4x128xf32>
    %26 = arith.subf %16, %25 : vector<4x128xf32>
    %cst_7 = arith.constant 1.000000e+00 : f32
    %27 = vector.broadcast %cst_7 : f32 to vector<4x128xf32>
    %28 = arith.subf %27, %23 : vector<4x128xf32>
    %29 = arith.mulf %28, %28 : vector<4x128xf32>
    %30 = arith.mulf %29, %26 : vector<4x128xf32>
    %31 = tpu.iota {dimensions = array<i32: 0>} : vector<4x128xi32>
    %32 = vector.broadcast %3 : vector<1x128xi32> to vector<4x128xi32>
    %33 = arith.cmpi eq, %31, %32 : vector<4x128xi32>
    %cst_8 = arith.constant 1.000000e+00 : f32
    %cst_9 = arith.constant 0.000000e+00 : f32
    %34 = vector.broadcast %cst_8 : f32 to vector<4x128xf32>
    %35 = vector.broadcast %cst_9 : f32 to vector<4x128xf32>
    %36 = arith.select %33, %34, %35 : vector<4x128xi1>, vector<4x128xf32>
    %cst_10 = arith.constant 9.99999997E-7 : f32
    %37 = vector.broadcast %cst_10 : f32 to vector<4x128xf32>
    %38 = arith.addf %36, %37 : vector<4x128xf32>
    %39 = arith.mulf %38, %30 : vector<4x128xf32>
    %cst_11 = arith.constant dense<0.000000e+00> : vector<128xf32>
    %40 = vector.multi_reduction <add>, %39, %cst_11 [0] : vector<4x128xf32> to vector<128xf32>
    %41 = vector.shape_cast %40 : vector<128xf32> to vector<1x128xf32>
    %cst_12 = arith.constant 0.000000e+00 : f32
    %42 = vector.broadcast %cst_12 : f32 to vector<1x128xf32>
    %43 = arith.select %12, %41, %42 : vector<1x128xi1>, vector<1x128xf32>
    %cst_13 = arith.constant -2.500000e-01 : f32
    %44 = vector.broadcast %cst_13 : f32 to vector<1x128xf32>
    %45 = arith.mulf %44, %43 : vector<1x128xf32>
    %c0_14 = arith.constant 0 : index
    %c0_15 = arith.constant 0 : index
    %c0_16 = arith.constant 0 : index
    %46 = vector.load %arg4[%c0_14, %c0_15, %c0_16] : memref<1x1x128xf32, #tpu.memory_space<vmem>>, vector<1x1x128xf32>
    %47 = vector.shape_cast %46 : vector<1x1x128xf32> to vector<1x128xf32>
    %48 = vector.shape_cast %45 : vector<1x128xf32> to vector<1x1x128xf32>
    tpu.vector_store %arg4[%c0_14, %c0_15, %c0_16], %48 {strides = array<i32>} : memref<1x1x128xf32, #tpu.memory_space<vmem>>, vector<1x1x128xf32>,
    return
  }
  func.func @transform_0(%arg0: i32, %arg1: i32) -> (i32, i32, i32) {
    %c0_i32 = arith.constant 0 : i32
    %c0_i32_0 = arith.constant 0 : i32
    return %arg0, %c0_i32, %arg1 : i32, i32, i32
  }
  func.func @transform_1(%arg0: i32, %arg1: i32) -> (i32, i32, i32) {
    %c0_i32 = arith.constant 0 : i32
    %c0_i32_0 = arith.constant 0 : i32
    return %arg0, %c0_i32, %arg1 : i32, i32, i32
  }
  func.func @transform_2(%arg0: i32, %arg1: i32) -> (i32, i32, i32) {
    %c0_i32 = arith.constant 0 : i32
    %c0_i32_0 = arith.constant 0 : i32
    return %arg0, %c0_i32, %arg1 : i32, i32, i32
  }
}

</mosaic_0001>

<llo_original>
// kernel: tpu_custom_call.1
$region0: #{tpu_custom_call.1}
  #allocation0 [shape = 'u32[]', space=smem, size = 0x4, offset = 0x4, fixed_abs, tag = 'smem constant byte address 0x4 - core index']
  #allocation1 [shape = 'u32[144,128]{1,0:T(1,128)}', space=vmem, size = 0x12000, scoped, tag = 'internal scratch']
  %s0 = inlined_call_operand.hbm [shape: f32[2,4,256], index: 0, kind: input, shape index: {}]
  %s1 = inlined_call_operand.hbm [shape: s32[2,1,256], index: 1, kind: input, shape index: {}]
  %s2 = inlined_call_operand.hbm [shape: f32[2,1,256], index: 2, kind: output, shape index: {}]
  %s3 = sld [smem:[#allocation0]]
  $region49: #{tpu_custom_call.1} parent=0
    _
  %s5 = ssub.s32 1, %s3
  %s6 = scalar_select 0, %s5, %s3
  $region1: #{tpu_custom_call.1} parent=0
    #allocation2 [shape = 'u8[4096]{0}', space=vmem, size = 0x1000, scoped, tag = 'input window, operand 0']
    #allocation3 [shape = 's32[2]{0}', space=sflag, size = 0x8, scoped, tag = 'scoped memory for tpu_custom_call.1']
    #allocation4 [shape = 's32[2]{0}', space=sflag, size = 0x8, scoped, tag = 'scoped memory for tpu_custom_call.1']
    #allocation5 [shape = 'u8[1024]{0}', space=vmem, size = 0x400, scoped, tag = 'input window, operand 1']
    #allocation6 [shape = 's32[2]{0}', space=sflag, size = 0x8, scoped, tag = 'scoped memory for tpu_custom_call.1']
    #allocation7 [shape = 'u8[1024]{0}', space=vmem, size = 0x400, scoped, tag = 'output window, operand 0']
    %7 = vsyncpa [#allocation3], 0
    %s8 = scalar_lea.sflag [#allocation3], 1
    %9 = vsyncpa %s8, 0
    %10 = vsyncpa [#allocation6], 0
    %s11 = scalar_lea.sflag [#allocation6], 1
    %12 = vsyncpa %s11, 0
    %13 = vsyncpa [#allocation4], 0
    %s14 = scalar_lea.sflag [#allocation4], 1
    %15 = vsyncpa %s14, 0
    loop: start=0, step=1, limit=6
    $region2: #{tpu_custom_call.1} parent=1 // loop_pre_header
      _
    $region3: #{tpu_custom_call.1} parent=1 // loop_header
      %s17 = sphi 0, %s21
      %p18 = scmp.ge.s32.totalorder %s17, 6
      %s24 = sphi 0, %s36
      %s25 = sphi 0, %s32
      %s26 = sphi 0, %s24
      %s27 = sphi 0, %s25
      %s28 = sphi 0, %s26
      %s29 = sphi 0, %s27
      %s41 = sphi 0, %s43
      %s44 = sphi 0, %s41
      %s45 = sphi 0, %s44
      %s61 = sphi 0, %s45
      %s69 = sphi 0, %s71
      %s72 = sphi 0, %s69
      %s73 = sphi 0, %s72
      %s89 = sphi 0, %s73
      %s97 = sphi 0, %s99
      %s100 = sphi 0, %s97
      %s101 = sphi 0, %s100
      %s117 = sphi 0, %s101
    $region4: #{tpu_custom_call.1} parent=1 // loop_header_branch
      %20 = sbr.rel (%p18) target = $region8
    $region5: #{tpu_custom_call.1} parent=1 // loop_body
      %s22 = ssub.s32 %s17, 1
      %s23 = ssub.s32 %s17, 2
      %s30 = sadd.s32 1, %s25
      %p31 = scmp.ge.s32.totalorder %s30, 2
      %s32 = scalar_select %p31, 0, %s30
      %s33 = sadd.s32 1, %s24
      %s34 = scalar_select %p31, %s33, %s24
      %p35 = scmp.ge.s32.totalorder %s34, 2
      %s36 = scalar_select %p35, 0, %s34
      %s37 = ssub.s32 %s24, %s36
      %s38 = ssub.s32 %s25, %s32
      %s39 = sor.u32 %s37, %s38
      %p40 = scmp.eq.s32.totalorder %s39, 0
      %s42 = sadd.s32 %s41, 1
      %s43 = scalar_select %p40, %s41, %s42
      %p46 = pneg %p40
      %p47 = scmp.eq.s32.totalorder %s17, 3
      %p48 = por %p46, %p47
      %p49 = scmp.ne.s32.totalorder %s41, %s44
      %p50 = scmp.eq.s32.totalorder %s17, 0
      %p51 = por %p49, %p50
      %p52 = scmp.ne.s32.totalorder %s41, %s44
      %p53 = scmp.eq.s32.totalorder %s22, 3
      %p54 = por %p52, %p53
      %p55 = scmp.ne.s32.totalorder %s44, %s45
      %p56 = scmp.eq.s32.totalorder %s22, 0
      %p57 = por %p55, %p56
      %p58 = scmp.ne.s32.totalorder %s44, %s45
      %p59 = scmp.eq.s32.totalorder %s23, 3
      %p60 = por %p58, %p59
      %p62 = scmp.ne.s32.totalorder %s45, %s61
      %p63 = scmp.eq.s32.totalorder %s23, 0
      %p64 = por %p62, %p63
      %s65 = ssub.s32 %s24, %s36
      %s66 = ssub.s32 %s25, %s32
      %s67 = sor.u32 %s65, %s66
      %p68 = scmp.eq.s32.totalorder %s67, 0
      %s70 = sadd.s32 %s69, 1
      %s71 = scalar_select %p68, %s69, %s70
      %p74 = pneg %p68
      %p75 = scmp.eq.s32.totalorder %s17, 3
      %p76 = por %p74, %p75
      %p77 = scmp.ne.s32.totalorder %s69, %s72
      %p78 = scmp.eq.s32.totalorder %s17, 0
      %p79 = por %p77, %p78
      %p80 = scmp.ne.s32.totalorder %s69, %s72
      %p81 = scmp.eq.s32.totalorder %s22, 3
      %p82 = por %p80, %p81
      %p83 = scmp.ne.s32.totalorder %s72, %s73
      %p84 = scmp.eq.s32.totalorder %s22, 0
      %p85 = por %p83, %p84
      %p86 = scmp.ne.s32.totalorder %s72, %s73
      %p87 = scmp.eq.s32.totalorder %s23, 3
      %p88 = por %p86, %p87
      %p90 = scmp.ne.s32.totalorder %s73, %s89
      %p91 = scmp.eq.s32.totalorder %s23, 0
      %p92 = por %p90, %p91
      %s93 = ssub.s32 %s24, %s36
      %s94 = ssub.s32 %s25, %s32
      %s95 = sor.u32 %s93, %s94
      %p96 = scmp.eq.s32.totalorder %s95, 0
      %s98 = sadd.s32 %s97, 1
      %s99 = scalar_select %p96, %s97, %s98
      %p102 = pneg %p96
      %p103 = scmp.eq.s32.totalorder %s17, 3
      %p104 = por %p102, %p103
      %p105 = scmp.ne.s32.totalorder %s97, %s100
      %p106 = scmp.eq.s32.totalorder %s17, 0
      %p107 = por %p105, %p106
      %p108 = scmp.ne.s32.totalorder %s97, %s100
      %p109 = scmp.eq.s32.totalorder %s22, 3
      %p110 = por %p108, %p109
      %p111 = scmp.ne.s32.totalorder %s100, %s101
      %p112 = scmp.eq.s32.totalorder %s22, 0
      %p113 = por %p111, %p112
      %p114 = scmp.ne.s32.totalorder %s100, %s101
      %p115 = scmp.eq.s32.totalorder %s23, 3
      %p116 = por %p114, %p115
      %p118 = scmp.ne.s32.totalorder %s101, %s117
      %p119 = scmp.eq.s32.totalorder %s23, 0
      %p120 = por %p118, %p119
      %p121 = scmp.le.s32.totalorder 1, %s17
      %p122 = scmp.lt.s32.totalorder %s17, 5
      %p123 = pnand %p121, %p122
      %p124 = pneg %p123
      // Predicated region
      $region9: #{tpu_custom_call.1} parent=5 // pred_check
        _
      $region10: #{tpu_custom_call.1} parent=5 // pred_check_branch
        %126 = sbr.rel (%p123) target = $region12
      $region11: #{tpu_custom_call.1} parent=5 // pred_region
        %s127 = ssub.s32 %s17, 1
      $region12: #{tpu_custom_call.1} parent=5 // pred_fallthru
        _
      %p128 = scmp.lt.s32.totalorder %s17, 4
      // Predicated region
      $region13: #{tpu_custom_call.1} parent=5 // pred_check
        %p129 = pneg %p128
      $region14: #{tpu_custom_call.1} parent=5 // pred_check_branch
        %131 = sbr.rel (%p129) target = $region16
      $region15: #{tpu_custom_call.1} parent=5 // pred_region
        // Predicated region
        $region17: #{tpu_custom_call.1} parent=15 // pred_check
          %p132 = pneg %p51
        $region18: #{tpu_custom_call.1} parent=15 // pred_check_branch
          %134 = sbr.rel (%p132) target = $region20
        $region19: #{tpu_custom_call.1} parent=15 // pred_region
          %s135 = sand.u32 %s41, 1
          %s136 = scalar_lea.sflag [#allocation3], %s135
          %s137 = sand.u32 %s41, 1
          %s138 = smul.addr %s137, 4
          %s139 = scalar_lea.vmem [#allocation2], %s138
          %s141 = ssub.s32 64, 64
          %142 = vsyncadd %s136, %s141
          %s143 = smul.addr %s24, 2
          %s144 = sadd.s32 %s25, %s143
          %s145 = smul.addr %s144, 64
          %s146 = scalar_lea.hbm %s0, %s145
          %s148 = sshll.u32 %s139, 4
          %s149 = int_to_ptr.vmem [resolvable:$true] %s148
          %151 = dma.hbm_to_vmem [thread:$0]  %s146, 64, %s149, %s136
        $region20: #{tpu_custom_call.1} parent=15 // pred_fallthru
          _
        // Predicated region
        $region21: #{tpu_custom_call.1} parent=15 // pred_check
          %p152 = pneg %p79
        $region22: #{tpu_custom_call.1} parent=15 // pred_check_branch
          %154 = sbr.rel (%p152) target = $region24
        $region23: #{tpu_custom_call.1} parent=15 // pred_region
          %s155 = sand.u32 %s69, 1
          %s156 = scalar_lea.sflag [#allocation6], %s155
          %s157 = sand.u32 %s69, 1
          %s158 = scalar_lea.vmem [#allocation5], %s157
          %s160 = ssub.s32 16, 16
          %161 = vsyncadd %s156, %s160
          %s162 = smul.addr %s24, 2
          %s163 = sadd.s32 %s25, %s162
          %s164 = smul.addr %s163, 16
          %s165 = scalar_lea.hbm %s1, %s164
          %s167 = sshll.u32 %s158, 4
          %s168 = int_to_ptr.vmem [resolvable:$true] %s167
          %170 = dma.hbm_to_vmem [thread:$0]  %s165, 16, %s168, %s156
        $region24: #{tpu_custom_call.1} parent=15 // pred_fallthru
          _
      $region16: #{tpu_custom_call.1} parent=5 // pred_fallthru
        _
      %p171 = scmp.le.s32.totalorder 1, %s17
      %p172 = scmp.lt.s32.totalorder %s17, 5
      %p173 = pnand %p171, %p172
      %p174 = pneg %p173
      // Predicated region
      $region25: #{tpu_custom_call.1} parent=5 // pred_check
        _
      $region26: #{tpu_custom_call.1} parent=5 // pred_check_branch
        %176 = sbr.rel (%p173) target = $region28
      $region27: #{tpu_custom_call.1} parent=5 // pred_region
        %s177 = ssub.s32 %s17, 1
        %s178 = sand.u32 %s44, 1
        %s179 = scalar_lea.sflag [#allocation3], %s178
        %s180 = sand.u32 %s44, 1
        %s181 = smul.addr %s180, 4
        %s182 = scalar_lea.vmem [#allocation2], %s181
        // Predicated region
        $region29: #{tpu_custom_call.1} parent=27 // pred_check
          %p183 = pneg %p57
        $region30: #{tpu_custom_call.1} parent=27 // pred_check_branch
          %185 = sbr.rel (%p183) target = $region32
        $region31: #{tpu_custom_call.1} parent=27 // pred_region
          %186 = dma.done %s179, 64
        $region32: #{tpu_custom_call.1} parent=27 // pred_fallthru
          _
        %s187 = sand.u32 %s72, 1
        %s188 = scalar_lea.sflag [#allocation6], %s187
        %s189 = sand.u32 %s72, 1
        %s190 = scalar_lea.vmem [#allocation5], %s189
        // Predicated region
        $region33: #{tpu_custom_call.1} parent=27 // pred_check
          %p191 = pneg %p85
        $region34: #{tpu_custom_call.1} parent=27 // pred_check_branch
          %193 = sbr.rel (%p191) target = $region36
        $region35: #{tpu_custom_call.1} parent=27 // pred_region
          %194 = dma.done %s188, 16
        $region36: #{tpu_custom_call.1} parent=27 // pred_fallthru
          _
        %s195 = sand.u32 %s44, 1
        %s196 = scalar_lea.sflag [#allocation3], %s195
        %s197 = sand.u32 %s44, 1
        %s198 = smul.addr %s197, 4
        %s199 = scalar_lea.vmem [#allocation2], %s198
        %p200 = pneg %p57
        %p201 = pneg %p54
        %s202 = sand.u32 %s72, 1
        %s203 = scalar_lea.sflag [#allocation6], %s202
        %s204 = sand.u32 %s72, 1
        %s205 = scalar_lea.vmem [#allocation5], %s204
        %p206 = pneg %p85
        %p207 = pneg %p82
        %p208 = pneg %p113
        %p209 = pneg %p110
        %s210 = sand.u32 %s100, 1
        %s211 = scalar_lea.sflag [#allocation4], %s210
        %s212 = sand.u32 %s100, 1
        %s213 = scalar_lea.vmem [#allocation7], %s212
        %v214 = vld [vmem:[%s182] sm:$0xf]
        %v215 = vld [vmem:[%s190] sm:$0x1]
        %s216 = smul.u32 %s27, 128
        %v217 = vlaneseq
        %v218 = vand.u32 %v217, 127
        %v219 = vstv %s216
        %v220 = vadd.s32 %v219, %v218
        %vm221 = vcmp.lt.s32.totalorder %v220, 256
        %vm222 = vcmp.ne.s32.totalorder %v215, 4294967295
        %vm223 = vmand %vm221, %vm222
        %vm224 = vcmask 1043456
        %v225 = vsel %vm224, %v214, -inf
        %v226 = vrot.slane %v225, 4
        %v227 = vmax.f32 %v225, %v226
        %v228 = vrot.slane %v227, 2
        %v229 = vmax.f32 %v227, %v228
        %v230 = vrot.slane %v229, 1
        %v231 = vmax.f32 %v229, %v230
        %v232 = vsub.f32 %v214, %v231
        %v233 = vmul.f32 %v232, 1.442695
        %v234 = vpow.pop %v233
        %v235 = vsel %vm224, %v234, 0.0
        %v236 = vrot.slane %v235, 4
        %v237 = vadd.f32 %v235, %v236
        %v238 = vrot.slane %v237, 2
        %v239 = vadd.f32 %v237, %v238
        %v240 = vrot.slane %v239, 1
        %v241 = vadd.f32 %v239, %v240
        %v242 = vrcp.pop %v241
        %v243 = vmul.f32 1.0, %v242
        %v244 = vmul.f32 %v234, %v243
        %v245 = vlog2.pop %v241
        %v246 = vmul.f32 %v245, 0.6931472
        %v247 = vsub.f32 %v232, %v246
        %v248 = vsub.f32 1.0, %v244
        %v249 = vmul.f32 %v248, %v248
        %v250 = vmul.f32 %v249, %v247
        %v251 = vlaneseq
        %v252 = vshrl.u32 %v251, 7
        %v253 = vlaneseq
        %v254 = vshrl.u32 %v253, 7
        %v255 = vsub.s32 0, %v254
        %v256 = vrot.slane %v215, %v255
        %vm257 = vcmp.eq.s32.totalorder %v252, %v256
        %v258 = vsel %vm257, 1.0, 0.0
        %v259 = vadd.f32 %v258, 1e-06
        %v260 = vmul.f32 %v259, %v250
        %v261 = vsel %vm224, %v260, 0.0
        %v262 = vrot.slane %v261, 4
        %v263 = vadd.f32 %v261, %v262
        %v264 = vrot.slane %v263, 2
        %v265 = vadd.f32 %v263, %v264
        %v266 = vrot.slane %v265, 1
        %v267 = vadd.f32 %v265, %v266
        %v268 = vsel %vm223, %v267, 0.0
        %v269 = vmul.f32 %v268, -0.25
        %270 = vst [vmem:[%s213] sm:$0x1] %v269
        %s271 = sand.u32 %s100, 1
        %s272 = scalar_lea.sflag [#allocation4], %s271
        %s273 = sand.u32 %s100, 1
        %s274 = scalar_lea.vmem [#allocation7], %s273
        // Predicated region
        $region37: #{tpu_custom_call.1} parent=27 // pred_check
          %p275 = pneg %p110
        $region38: #{tpu_custom_call.1} parent=27 // pred_check_branch
          %277 = sbr.rel (%p275) target = $region40
        $region39: #{tpu_custom_call.1} parent=27 // pred_region
          %s279 = ssub.s32 16, 16
          %280 = vsyncadd %s272, %s279
          %s281 = smul.addr %s26, 2
          %s282 = sadd.s32 %s27, %s281
          %s283 = smul.addr %s282, 16
          %s284 = scalar_lea.hbm %s2, %s283
          %s286 = sshll.u32 %s274, 4
          %s287 = int_to_ptr.vmem [resolvable:$true] %s286
          %289 = dma.vmem_to_hbm [thread:$0]  %s287, 16, %s284, %s272
        $region40: #{tpu_custom_call.1} parent=27 // pred_fallthru
          _
      $region28: #{tpu_custom_call.1} parent=5 // pred_fallthru
        _
      %p290 = scmp.le.s32.totalorder 2, %s17
      // Predicated region
      $region41: #{tpu_custom_call.1} parent=5 // pred_check
        %p291 = pneg %p290
      $region42: #{tpu_custom_call.1} parent=5 // pred_check_branch
        %293 = sbr.rel (%p291) target = $region44
      $region43: #{tpu_custom_call.1} parent=5 // pred_region
        %s294 = ssub.s32 %s17, 2
        // Predicated region
        $region45: #{tpu_custom_call.1} parent=43 // pred_check
          %p295 = pneg %p116
        $region46: #{tpu_custom_call.1} parent=43 // pred_check_branch
          %297 = sbr.rel (%p295) target = $region48
        $region47: #{tpu_custom_call.1} parent=43 // pred_region
          %s298 = sand.u32 %s101, 1
          %s299 = scalar_lea.sflag [#allocation4], %s298
          %s300 = sand.u32 %s101, 1
          %s301 = scalar_lea.vmem [#allocation7], %s300
          %302 = dma.done %s299, 16
        $region48: #{tpu_custom_call.1} parent=43 // pred_fallthru
          _
      $region44: #{tpu_custom_call.1} parent=5 // pred_fallthru
        _
    $region6: #{tpu_custom_call.1} parent=1 // loop_footer
      %s21 = sadd.s32 1, %s17
    $region7: #{tpu_custom_call.1} parent=1 // loop_footer_branch
      %16 = sbr.rel target = $region3
    $region8: #{tpu_custom_call.1} parent=1 // loop_exit
      _
    %303 = vsyncpa [#allocation3], 1
    %s304 = scalar_lea.sflag [#allocation3], 1
    %305 = vsyncpa %s304, 1
    %306 = vsyncpa [#allocation6], 1
    %s307 = scalar_lea.sflag [#allocation6], 1
    %308 = vsyncpa %s307, 1
    %309 = vsyncpa [#allocation4], 1
    %s310 = scalar_lea.sflag [#allocation4], 1
    %311 = vsyncpa %s310, 1

</llo_original>
